<compile_context>
chip_gen: v6e
topology: v6e:2x2x1
jax: 0.10.0
libtpu: 0.0.40
codegen_flags: <defaults>
</compile_context>

<pallas_src>
import math
import numpy as np
import jax
import jax.numpy as jnp
from jax.experimental import pallas as pl
from jax.experimental.pallas import tpu as pltpu


def _round_up(x, m):
    return ((x + m - 1) // m) * m


def _cdiv(a, b):
    return -(-a // b)


def _vmem_capacity_bytes():
    """Generation-aware VMEM capacity; conservative fallback = v7x (64 MiB)."""
    try:
        info = pltpu.get_tpu_info()
        cap = getattr(info, "vmem_capacity_bytes", None)
        if cap:
            return int(cap)
    except Exception:
        pass
    return 64 << 20


def _make_mask_kernel(num_sets, patch_size, gh_tile, w_pad):
    big_shape = (gh_tile, patch_size, w_pad)

    def kernel(ids_ref, *out_refs):
        # ids_ref: (1, gh_tile, 1, w_pad) int32 set-id per (grid row, pixel col).
        ids = ids_ref[0]                                    # (gh_tile, 1, w_pad)
        # Per set: one VPU compare + sublane broadcast (the patch row-repeat)
        # + dense store.  `ids` stays in vregs across the small unrolled loop.
        for s in range(num_sets):
            m = (ids != s).astype(jnp.float32)              # (gh_tile, 1, w_pad)
            out_refs[s][...] = jnp.broadcast_to(m, big_shape)

    return kernel


class PatchMaskPallas:
    """JAX/Pallas port of PatchMask (forward only)."""

    def __init__(self, num_disjoint_sets, img_size, num_channels=3, seed=0):
        self.num_disjoint_sets = num_disjoint_sets
        self.img_h, self.img_w = img_size
        self.num_channels = num_channels  # unused in forward (matches PyTorch)
        self._base_key = jax.random.PRNGKey(seed)
        self._call_count = 0
        self._fns = {}  # patch_size -> cached jitted forward fn

    def _build(self, patch_size):
        num_sets = self.num_disjoint_sets
        grid_h = math.ceil(self.img_h / patch_size)
        grid_w = math.ceil(self.img_w / patch_size)
        num_grids = grid_h * grid_w
        h_out = grid_h * patch_size
        w_out = grid_w * patch_size
        w_pad = _round_up(w_out, 128)

        # np.array_split chunk sizes (first `rem` chunks are one larger).
        base, rem = divmod(num_grids, num_sets)
        sizes = [base + 1 if i < rem else base for i in range(num_sets)]
        chunk_ids = jnp.asarray(
            np.repeat(np.arange(num_sets, dtype=np.int32), sizes))

        # --- generation-aware VMEM budget & row tiling (grid-row units) ---
        vmem_cap = _vmem_capacity_bytes()
        budget = min(vmem_cap // 3, 24 << 20)
        patch8 = _round_up(patch_size, 8)
        # Per grid-row VMEM bytes: double-buffered input block (sublane-padded
        # to 8) + double-buffered num_sets output blocks.
        bytes_per_gh = 2 * w_pad * 4 * (8 + num_sets * patch8)
        gh_max = max(1, budget // bytes_per_gh)
        n_tiles = _cdiv(grid_h, gh_max)
        if grid_h >= 2:
            n_tiles = max(n_tiles, 2)      # v7x has 2 TensorCores: >= 2 steps
        n_tiles = min(n_tiles, grid_h)
        gh_tile = _cdiv(grid_h, n_tiles)
        n_tiles = _cdiv(grid_h, gh_tile)
        grid_h_pad = n_tiles * gh_tile     # waste <= n_tiles - 1 grid rows
        h_pad = grid_h_pad * patch_size

        est_vmem = bytes_per_gh * gh_tile
        vmem_limit = int(min(vmem_cap, max(est_vmem + (8 << 20), 32 << 20)))

        kernel = _make_mask_kernel(num_sets, patch_size, gh_tile, w_pad)
        call = pl.pallas_call(
            kernel,
            out_shape=tuple(
                jax.ShapeDtypeStruct((grid_h_pad, patch_size, w_pad), jnp.float32)
                for _ in range(num_sets)),
            grid_spec=pltpu.PrefetchScalarGridSpec(
                num_scalar_prefetch=0,
                grid=(n_tiles,),
                in_specs=[pl.BlockSpec((1, gh_tile, 1, w_pad),
                                       lambda r: (r, 0, 0, 0))],
                out_specs=[pl.BlockSpec((gh_tile, patch_size, w_pad),
                                        lambda r: (r, 0, 0))
                           for _ in range(num_sets)],
            ),
            compiler_params=pltpu.CompilerParams(
                dimension_semantics=("parallel",),
                vmem_limit_bytes=vmem_limit,
            ),
        )

        sentinel = num_sets  # never matches a set -> padding pixels become 1.0
        needs_crop = (h_pad != h_out) or (w_pad != w_out)

        def fn(key):
            # Whole forward is device-resident: permutation, array_split
            # scatter, lane expansion of the tiny grid, then the Pallas kernel.
            perm = jax.random.permutation(key, num_grids)
            set_flat = jnp.zeros((num_grids,), jnp.int32).at[perm].set(chunk_ids)
            set_id = set_flat.reshape(grid_h, grid_w)
            row_ids = jnp.repeat(set_id, patch_size, axis=1)    # (grid_h, w_out)
            row_ids = jnp.pad(
                row_ids,
                ((0, grid_h_pad - grid_h), (0, w_pad - w_out)),
                constant_values=sentinel)
            ids4 = row_ids.reshape(n_tiles, gh_tile, 1, w_pad)
            masks = call(ids4)
            masks = [m.reshape(h_pad, w_pad) for m in masks]    # free contiguous reshape
            if needs_crop:
                masks = [m[:h_out, :w_out] for m in masks]
            return tuple(masks)

        return jax.jit(fn)

    def forward(self, patch_size):
        fn = self._fns.get(patch_size)
        if fn is None:
            fn = self._build(patch_size)
            self._fns[patch_size] = fn
        # TODO(synk): per-call RNG statefulness (fold_in of a host counter)
        # mirrors torch's fresh permutation per forward(); it is host-side and
        # not itself jit-traceable, by design.
        key = jax.random.fold_in(self._base_key, self._call_count)
        self._call_count += 1
        return list(fn(key))

    __call__ = forward


if __name__ == "__main__":
    # Small, module-consistent shapes: img 16x16, 4 disjoint sets, patch 4.
    num_disjoint_sets = 4
    img_size = (16, 16)
    patch_size = 4

    module = PatchMaskPallas(num_disjoint_sets, img_size, num_channels=3, seed=0)
    disjoint_masks = module(patch_size)
    disjoint_masks = [jax.block_until_ready(m) for m in disjoint_masks]

    stacked = jnp.stack(disjoint_masks, axis=0)
    assert stacked.shape == (num_disjoint_sets, 16, 16)
    assert stacked.dtype == jnp.float32
    # Binary masks.
    assert bool(jnp.all((stacked == 0.0) | (stacked == 1.0)))
    # Every pixel is zeroed in exactly one mask (disjoint cover).
    zeros_per_pixel = jnp.sum(1.0 - stacked, axis=0)
    assert bool(jnp.all(zeros_per_pixel == 1.0))
    # np.array_split(16, 4) -> 4 grid cells per set -> 4 * patch^2 zeros/mask.
    zeros_per_mask = jnp.sum(1.0 - stacked, axis=(1, 2))
    assert bool(jnp.all(zeros_per_mask == 4 * patch_size * patch_size))

    # Second call reuses the cached compiled function with a fresh permutation.
    masks2 = [jax.block_until_ready(m) for m in module(patch_size)]
    stacked2 = jnp.stack(masks2, axis=0)
    assert bool(jnp.all(jnp.sum(1.0 - stacked2, axis=0) == 1.0))

    print("KERNEL_OK")
</pallas_src>

<mosaic_0001>
module attributes {stable_mosaic.version = 11 : i64} {
  func.func @kernel(%arg0: i32, %arg1: memref<1x2x1x128xi32, #tpu.memory_space<vmem>>, %arg2: memref<2x4x128xf32, #tpu.memory_space<vmem>>, %arg3: memref<2x4x128xf32, #tpu.memory_space<vmem>>, %arg4: memref<2x4x128xf32, #tpu.memory_space<vmem>>, %arg5: memref<2x4x128xf32, #tpu.memory_space<vmem>>) attributes {dimension_semantics = [#tpu.dimension_semantics<parallel>], iteration_bounds = array<i64: 2>, scalar_prefetch = 0 : i64, scratch_operands = 0 : i64, tpu.core_type = #tpu.core_type<tc>, window_params = [{transform_indices = @transform_0, window_bounds = array<i64: 1, 2, 1, 128>}, {transform_indices = @transform_1, window_bounds = array<i64: 2, 4, 128>}, {transform_indices = @transform_2, window_bounds = array<i64: 2, 4, 128>}, {transform_indices = @transform_3, window_bounds = array<i64: 2, 4, 128>}, {transform_indices = @transform_4, window_bounds = array<i64: 2, 4, 128>}]} {
    %c0 = arith.constant 0 : index
    %c0_0 = arith.constant 0 : index
    %c0_1 = arith.constant 0 : index
    %c0_2 = arith.constant 0 : index
    %0 = vector.load %arg1[%c0, %c0_0, %c0_1, %c0_2] : memref<1x2x1x128xi32, #tpu.memory_space<vmem>>, vector<1x2x1x128xi32>
    %1 = vector.shape_cast %0 : vector<1x2x1x128xi32> to vector<2x1x128xi32>
    %c0_i32 = arith.constant 0 : i32
    %2 = vector.broadcast %c0_i32 : i32 to vector<2x1x128xi32>
    %3 = arith.cmpi ne, %1, %2 : vector<2x1x128xi32>
    %4 = arith.extui %3 : vector<2x1x128xi1> to vector<2x1x128xi32>
    %5 = arith.sitofp %4 : vector<2x1x128xi32> to vector<2x1x128xf32>
    %6 = vector.shape_cast %5 : vector<2x1x128xf32> to vector<2x1x128xf32>
    %7 = vector.broadcast %6 : vector<2x1x128xf32> to vector<2x4x128xf32>
    %c0_3 = arith.constant 0 : index
    %c0_4 = arith.constant 0 : index
    %c0_5 = arith.constant 0 : index
    %8 = vector.load %arg2[%c0_3, %c0_4, %c0_5] : memref<2x4x128xf32, #tpu.memory_space<vmem>>, vector<2x4x128xf32>
    tpu.vector_store %arg2[%c0_3, %c0_4, %c0_5], %7 {strides = array<i32>} : memref<2x4x128xf32, #tpu.memory_space<vmem>>, vector<2x4x128xf32>,
    %c1_i32 = arith.constant 1 : i32
    %9 = vector.broadcast %c1_i32 : i32 to vector<2x1x128xi32>
    %10 = arith.cmpi ne, %1, %9 : vector<2x1x128xi32>
    %11 = arith.extui %10 : vector<2x1x128xi1> to vector<2x1x128xi32>
    %12 = arith.sitofp %11 : vector<2x1x128xi32> to vector<2x1x128xf32>
    %13 = vector.shape_cast %12 : vector<2x1x128xf32> to vector<2x1x128xf32>
    %14 = vector.broadcast %13 : vector<2x1x128xf32> to vector<2x4x128xf32>
    %c0_6 = arith.constant 0 : index
    %c0_7 = arith.constant 0 : index
    %c0_8 = arith.constant 0 : index
    %15 = vector.load %arg3[%c0_6, %c0_7, %c0_8] : memref<2x4x128xf32, #tpu.memory_space<vmem>>, vector<2x4x128xf32>
    tpu.vector_store %arg3[%c0_6, %c0_7, %c0_8], %14 {strides = array<i32>} : memref<2x4x128xf32, #tpu.memory_space<vmem>>, vector<2x4x128xf32>,
    %c2_i32 = arith.constant 2 : i32
    %16 = vector.broadcast %c2_i32 : i32 to vector<2x1x128xi32>
    %17 = arith.cmpi ne, %1, %16 : vector<2x1x128xi32>
    %18 = arith.extui %17 : vector<2x1x128xi1> to vector<2x1x128xi32>
    %19 = arith.sitofp %18 : vector<2x1x128xi32> to vector<2x1x128xf32>
    %20 = vector.shape_cast %19 : vector<2x1x128xf32> to vector<2x1x128xf32>
    %21 = vector.broadcast %20 : vector<2x1x128xf32> to vector<2x4x128xf32>
    %c0_9 = arith.constant 0 : index
    %c0_10 = arith.constant 0 : index
    %c0_11 = arith.constant 0 : index
    %22 = vector.load %arg4[%c0_9, %c0_10, %c0_11] : memref<2x4x128xf32, #tpu.memory_space<vmem>>, vector<2x4x128xf32>
    tpu.vector_store %arg4[%c0_9, %c0_10, %c0_11], %21 {strides = array<i32>} : memref<2x4x128xf32, #tpu.memory_space<vmem>>, vector<2x4x128xf32>,
    %c3_i32 = arith.constant 3 : i32
    %23 = vector.broadcast %c3_i32 : i32 to vector<2x1x128xi32>
    %24 = arith.cmpi ne, %1, %23 : vector<2x1x128xi32>
    %25 = arith.extui %24 : vector<2x1x128xi1> to vector<2x1x128xi32>
    %26 = arith.sitofp %25 : vector<2x1x128xi32> to vector<2x1x128xf32>
    %27 = vector.shape_cast %26 : vector<2x1x128xf32> to vector<2x1x128xf32>
    %28 = vector.broadcast %27 : vector<2x1x128xf32> to vector<2x4x128xf32>
    %c0_12 = arith.constant 0 : index
    %c0_13 = arith.constant 0 : index
    %c0_14 = arith.constant 0 : index
    %29 = vector.load %arg5[%c0_12, %c0_13, %c0_14] : memref<2x4x128xf32, #tpu.memory_space<vmem>>, vector<2x4x128xf32>
    tpu.vector_store %arg5[%c0_12, %c0_13, %c0_14], %28 {strides = array<i32>} : memref<2x4x128xf32, #tpu.memory_space<vmem>>, vector<2x4x128xf32>,
    return
  }
  func.func @transform_0(%arg0: i32) -> (i32, i32, i32, i32) {
    %c0_i32 = arith.constant 0 : i32
    %c0_i32_0 = arith.constant 0 : i32
    %c0_i32_1 = arith.constant 0 : i32
    %c0_i32_2 = arith.constant 0 : i32
    return %arg0, %c0_i32, %c0_i32_0, %c0_i32_1 : i32, i32, i32, i32
  }
  func.func @transform_1(%arg0: i32) -> (i32, i32, i32) {
    %c0_i32 = arith.constant 0 : i32
    %c0_i32_0 = arith.constant 0 : i32
    %c0_i32_1 = arith.constant 0 : i32
    return %arg0, %c0_i32, %c0_i32_0 : i32, i32, i32
  }
  func.func @transform_2(%arg0: i32) -> (i32, i32, i32) {
    %c0_i32 = arith.constant 0 : i32
    %c0_i32_0 = arith.constant 0 : i32
    %c0_i32_1 = arith.constant 0 : i32
    return %arg0, %c0_i32, %c0_i32_0 : i32, i32, i32
  }
  func.func @transform_3(%arg0: i32) -> (i32, i32, i32) {
    %c0_i32 = arith.constant 0 : i32
    %c0_i32_0 = arith.constant 0 : i32
    %c0_i32_1 = arith.constant 0 : i32
    return %arg0, %c0_i32, %c0_i32_0 : i32, i32, i32
  }
  func.func @transform_4(%arg0: i32) -> (i32, i32, i32) {
    %c0_i32 = arith.constant 0 : i32
    %c0_i32_0 = arith.constant 0 : i32
    %c0_i32_1 = arith.constant 0 : i32
    return %arg0, %c0_i32, %c0_i32_0 : i32, i32, i32
  }
}

</mosaic_0001>

<llo_original>
// kernel: fn.1
$region0: #{fn.1}
  #allocation0 [shape = 'u32[]', space=smem, size = 0x4, offset = 0x4, fixed_abs, tag = 'smem constant byte address 0x4 - core index']
  #allocation1 [shape = 'u32[144,128]{1,0:T(1,128)}', space=vmem, size = 0x12000, scoped, tag = 'internal scratch']
  %s0 = inlined_call_operand.vmem [shape: s32[2,2,1,128], index: 0, kind: input, shape index: {}]
  %s1 = inlined_call_operand.hbm [shape: f32[4,4,128], index: 1, kind: output, shape index: {0}]
  %s2 = inlined_call_operand.hbm [shape: f32[4,4,128], index: 2, kind: output, shape index: {1}]
  %s3 = inlined_call_operand.hbm [shape: f32[4,4,128], index: 3, kind: output, shape index: {2}]
  %s4 = inlined_call_operand.hbm [shape: f32[4,4,128], index: 4, kind: output, shape index: {3}]
  %5 = xla_tuple %s1, %s2, %s3, %s4
  %s6 = sld [smem:[#allocation0]]
  $region61: #{fn.1} parent=0
    _
  %s8 = ssub.s32 1, %s6
  %s9 = scalar_select 0, %s8, %s6
  $region1: #{fn.1} parent=0
    #allocation2 [shape = 'u8[8192]{0}', space=vmem, size = 0x2000, scoped, tag = 'output window, operand 0']
    #allocation3 [shape = 's32[2]{0}', space=sflag, size = 0x8, scoped, tag = 'scoped memory for fn.1']
    #allocation4 [shape = 'u8[8192]{0}', space=vmem, size = 0x2000, scoped, tag = 'output window, operand 1']
    #allocation5 [shape = 's32[2]{0}', space=sflag, size = 0x8, scoped, tag = 'scoped memory for fn.1']
    #allocation6 [shape = 'u8[8192]{0}', space=vmem, size = 0x2000, scoped, tag = 'output window, operand 2']
    #allocation7 [shape = 'u8[8192]{0}', space=vmem, size = 0x2000, scoped, tag = 'output window, operand 3']
    #allocation8 [shape = 's32[2]{0}', space=sflag, size = 0x8, scoped, tag = 'scoped memory for fn.1']
    %10 = vsyncpa [#allocation3], 0
    %s11 = scalar_lea.sflag [#allocation3], 1
    %12 = vsyncpa %s11, 0
    %13 = vsyncpa [#allocation5], 0
    %s14 = scalar_lea.sflag [#allocation5], 1
    %15 = vsyncpa %s14, 0
    %16 = vsyncpa [#allocation8], 0
    %s17 = scalar_lea.sflag [#allocation8], 1
    %18 = vsyncpa %s17, 0
    loop: start=0, step=1, limit=4
    $region2: #{fn.1} parent=1 // loop_pre_header
      _
    $region3: #{fn.1} parent=1 // loop_header
      %s20 = sphi 0, %s24
      %p21 = scmp.ge.s32.totalorder %s20, 4
      %s30 = sphi 0, %s32
      %s33 = sphi 0, %s30
      %s34 = sphi 0, %s33
      %s50 = sphi 0, %s34
      %s56 = sphi 0, %s58
      %s59 = sphi 0, %s56
      %s60 = sphi 0, %s59
      %s76 = sphi 0, %s60
      %s82 = sphi 0, %s84
      %s85 = sphi 0, %s82
      %s86 = sphi 0, %s85
      %s102 = sphi 0, %s86
      %s108 = sphi 0, %s110
      %s111 = sphi 0, %s108
      %s112 = sphi 0, %s111
      %s128 = sphi 0, %s112
      %s134 = sphi 0, %s136
      %s137 = sphi 0, %s134
      %s138 = sphi 0, %s137
      %s154 = sphi 0, %s138
    $region4: #{fn.1} parent=1 // loop_header_branch
      %23 = sbr.rel (%p21) target = $region8
    $region5: #{fn.1} parent=1 // loop_body
      %s25 = ssub.s32 %s20, 1
      %s26 = ssub.s32 %s20, 2
      %s27 = sadd.s32 %s20, 1
      %s28 = ssub.s32 %s20, %s27
      %p29 = scmp.eq.s32.totalorder %s28, 0
      %s31 = sadd.s32 %s30, 1
      %s32 = scalar_select %p29, %s30, %s31
      %p35 = pneg %p29
      %p36 = scmp.eq.s32.totalorder %s20, 1
      %p37 = por %p35, %p36
      %p38 = scmp.ne.s32.totalorder %s30, %s33
      %p39 = scmp.eq.s32.totalorder %s20, 0
      %p40 = por %p38, %p39
      %p41 = scmp.ne.s32.totalorder %s30, %s33
      %p42 = scmp.eq.s32.totalorder %s25, 1
      %p43 = por %p41, %p42
      %p44 = scmp.ne.s32.totalorder %s33, %s34
      %p45 = scmp.eq.s32.totalorder %s25, 0
      %p46 = por %p44, %p45
      %p47 = scmp.ne.s32.totalorder %s33, %s34
      %p48 = scmp.eq.s32.totalorder %s26, 1
      %p49 = por %p47, %p48
      %p51 = scmp.ne.s32.totalorder %s34, %s50
      %p52 = scmp.eq.s32.totalorder %s26, 0
      %p53 = por %p51, %p52
      %s54 = ssub.s32 %s20, %s27
      %p55 = scmp.eq.s32.totalorder %s54, 0
      %s57 = sadd.s32 %s56, 1
      %s58 = scalar_select %p55, %s56, %s57
      %p61 = pneg %p55
      %p62 = scmp.eq.s32.totalorder %s20, 1
      %p63 = por %p61, %p62
      %p64 = scmp.ne.s32.totalorder %s56, %s59
      %p65 = scmp.eq.s32.totalorder %s20, 0
      %p66 = por %p64, %p65
      %p67 = scmp.ne.s32.totalorder %s56, %s59
      %p68 = scmp.eq.s32.totalorder %s25, 1
      %p69 = por %p67, %p68
      %p70 = scmp.ne.s32.totalorder %s59, %s60
      %p71 = scmp.eq.s32.totalorder %s25, 0
      %p72 = por %p70, %p71
      %p73 = scmp.ne.s32.totalorder %s59, %s60
      %p74 = scmp.eq.s32.totalorder %s26, 1
      %p75 = por %p73, %p74
      %p77 = scmp.ne.s32.totalorder %s60, %s76
      %p78 = scmp.eq.s32.totalorder %s26, 0
      %p79 = por %p77, %p78
      %s80 = ssub.s32 %s20, %s27
      %p81 = scmp.eq.s32.totalorder %s80, 0
      %s83 = sadd.s32 %s82, 1
      %s84 = scalar_select %p81, %s82, %s83
      %p87 = pneg %p81
      %p88 = scmp.eq.s32.totalorder %s20, 1
      %p89 = por %p87, %p88
      %p90 = scmp.ne.s32.totalorder %s82, %s85
      %p91 = scmp.eq.s32.totalorder %s20, 0
      %p92 = por %p90, %p91
      %p93 = scmp.ne.s32.totalorder %s82, %s85
      %p94 = scmp.eq.s32.totalorder %s25, 1
      %p95 = por %p93, %p94
      %p96 = scmp.ne.s32.totalorder %s85, %s86
      %p97 = scmp.eq.s32.totalorder %s25, 0
      %p98 = por %p96, %p97
      %p99 = scmp.ne.s32.totalorder %s85, %s86
      %p100 = scmp.eq.s32.totalorder %s26, 1
      %p101 = por %p99, %p100
      %p103 = scmp.ne.s32.totalorder %s86, %s102
      %p104 = scmp.eq.s32.totalorder %s26, 0
      %p105 = por %p103, %p104
      %s106 = ssub.s32 %s20, %s27
      %p107 = scmp.eq.s32.totalorder %s106, 0
      %s109 = sadd.s32 %s108, 1
      %s110 = scalar_select %p107, %s108, %s109
      %p113 = pneg %p107
      %p114 = scmp.eq.s32.totalorder %s20, 1
      %p115 = por %p113, %p114
      %p116 = scmp.ne.s32.totalorder %s108, %s111
      %p117 = scmp.eq.s32.totalorder %s20, 0
      %p118 = por %p116, %p117
      %p119 = scmp.ne.s32.totalorder %s108, %s111
      %p120 = scmp.eq.s32.totalorder %s25, 1
      %p121 = por %p119, %p120
      %p122 = scmp.ne.s32.totalorder %s111, %s112
      %p123 = scmp.eq.s32.totalorder %s25, 0
      %p124 = por %p122, %p123
      %p125 = scmp.ne.s32.totalorder %s111, %s112
      %p126 = scmp.eq.s32.totalorder %s26, 1
      %p127 = por %p125, %p126
      %p129 = scmp.ne.s32.totalorder %s112, %s128
      %p130 = scmp.eq.s32.totalorder %s26, 0
      %p131 = por %p129, %p130
      %s132 = ssub.s32 %s20, %s27
      %p133 = scmp.eq.s32.totalorder %s132, 0
      %s135 = sadd.s32 %s134, 1
      %s136 = scalar_select %p133, %s134, %s135
      %p139 = pneg %p133
      %p140 = scmp.eq.s32.totalorder %s20, 1
      %p141 = por %p139, %p140
      %p142 = scmp.ne.s32.totalorder %s134, %s137
      %p143 = scmp.eq.s32.totalorder %s20, 0
      %p144 = por %p142, %p143
      %p145 = scmp.ne.s32.totalorder %s134, %s137
      %p146 = scmp.eq.s32.totalorder %s25, 1
      %p147 = por %p145, %p146
      %p148 = scmp.ne.s32.totalorder %s137, %s138
      %p149 = scmp.eq.s32.totalorder %s25, 0
      %p150 = por %p148, %p149
      %p151 = scmp.ne.s32.totalorder %s137, %s138
      %p152 = scmp.eq.s32.totalorder %s26, 1
      %p153 = por %p151, %p152
      %p155 = scmp.ne.s32.totalorder %s138, %s154
      %p156 = scmp.eq.s32.totalorder %s26, 0
      %p157 = por %p155, %p156
      %p158 = scmp.le.s32.totalorder 1, %s20
      %p159 = scmp.lt.s32.totalorder %s20, 3
      %p160 = pnand %p158, %p159
      %p161 = pneg %p160
      // Predicated region
      $region9: #{fn.1} parent=5 // pred_check
        _
      $region10: #{fn.1} parent=5 // pred_check_branch
        %163 = sbr.rel (%p160) target = $region12
      $region11: #{fn.1} parent=5 // pred_region
        %s164 = ssub.s32 %s20, 1
      $region12: #{fn.1} parent=5 // pred_fallthru
        _
      %p165 = scmp.lt.s32.totalorder %s20, 2
      // Predicated region
      $region13: #{fn.1} parent=5 // pred_check
        %p166 = pneg %p165
      $region14: #{fn.1} parent=5 // pred_check_branch
        %168 = sbr.rel (%p166) target = $region16
      $region15: #{fn.1} parent=5 // pred_region
        // Predicated region
        $region17: #{fn.1} parent=15 // pred_check
          %p169 = pneg %p40
        $region18: #{fn.1} parent=15 // pred_check_branch
          %171 = sbr.rel (%p169) target = $region20
        $region19: #{fn.1} parent=15 // pred_region
          %p172 = scmp.lt.s32.totalorder %s20, 1
          %s173 = scalar_select %p172, %s20, 1
          %s174 = smul.addr %s173, 2
          %s175 = scalar_lea.vmem %s0, %s174
        $region20: #{fn.1} parent=15 // pred_fallthru
          _
      $region16: #{fn.1} parent=5 // pred_fallthru
        _
      %p176 = scmp.le.s32.totalorder 1, %s20
      %p177 = scmp.lt.s32.totalorder %s20, 3
      %p178 = pnand %p176, %p177
      %p179 = pneg %p178
      // Predicated region
      $region21: #{fn.1} parent=5 // pred_check
        _
      $region22: #{fn.1} parent=5 // pred_check_branch
        %181 = sbr.rel (%p178) target = $region24
      $region23: #{fn.1} parent=5 // pred_region
        %s182 = ssub.s32 %s20, 1
        %p183 = scmp.lt.s32.totalorder %s25, 1
        %s184 = scalar_select %p183, %s25, 1
        %s185 = smul.addr %s184, 2
        %s186 = scalar_lea.vmem %s0, %s185
        %p187 = pneg %p46
        %p188 = pneg %p43
        %p189 = pneg %p72
        %p190 = pneg %p69
        %s191 = sand.u32 %s59, 1
        %s192 = scalar_lea.sflag [#allocation3], %s191
        %s193 = sand.u32 %s59, 1
        %s194 = smul.addr %s193, 8
        %s195 = scalar_lea.vmem [#allocation2], %s194
        %p196 = pneg %p98
        %p197 = pneg %p95
        %s198 = sand.u32 %s25, 1
        %s199 = scalar_lea.sflag [#allocation5], %s198
        %s200 = sand.u32 %s85, 1
        %s201 = smul.addr %s200, 8
        %s202 = scalar_lea.vmem [#allocation4], %s201
        %p203 = pneg %p124
        %p204 = pneg %p121
        %s205 = sand.u32 %s25, 1
        %s206 = scalar_lea.sflag [#allocation5], %s205
        %s207 = sand.u32 %s111, 1
        %s208 = smul.addr %s207, 8
        %s209 = scalar_lea.vmem [#allocation6], %s208
        %p210 = pneg %p150
        %p211 = pneg %p147
        %s212 = sand.u32 %s137, 1
        %s213 = scalar_lea.sflag [#allocation8], %s212
        %s214 = sand.u32 %s137, 1
        %s215 = smul.addr %s214, 8
        %s216 = scalar_lea.vmem [#allocation7], %s215
        %p217 = scmp.lt.s32.totalorder %s25, 1
        %s218 = scalar_select %p217, %s25, 1
        %s219 = smul.addr %s218, 2
        %s220 = scalar_lea.vmem %s0, %s219
        %s221 = smul.u32 2, %s25
        %s222 = smul.u32 2, %s25
        %s223 = smul.u32 2, %s25
        %s224 = smul.u32 2, %s25
        %v225 = vld [vmem:[%s220] sm:$0x1]
        %v226 = vld [vmem:[%s220 + $0x1] sm:$0x1]
        %vm227 = vcmp.ne.s32.totalorder %v225, 0
        %vm228 = vcmp.ne.s32.totalorder %v226, 0
        %v229 = vsel %vm227, 1, 0
        %v230 = vsel %vm228, 1, 0
        %v231 = vcvt.s32.f32 %v229
        %v232 = vcvt.s32.f32 %v230
        %v235 = vlaneseq
        %v236 = vshrl.u32 %v235, 7
        %v237 = vsub.s32 0, %v236
        %v238 = vrot.slane %v231, %v237
        %v239 = vlaneseq
        %v240 = vshrl.u32 %v239, 7
        %v241 = vsub.s32 0, %v240
        %v242 = vrot.slane %v232, %v241
        %245 = vst [vmem:[%s195] sm:$0xf] %v238
        %246 = vst [vmem:[%s195 + $0x4] sm:$0xf] %v242
        %vm247 = vcmp.ne.s32.totalorder %v225, 1
        %vm248 = vcmp.ne.s32.totalorder %v226, 1
        %v249 = vsel %vm247, 1, 0
        %v250 = vsel %vm248, 1, 0
        %v251 = vcvt.s32.f32 %v249
        %v252 = vcvt.s32.f32 %v250
        %v255 = vlaneseq
        %v256 = vshrl.u32 %v255, 7
        %v257 = vsub.s32 0, %v256
        %v258 = vrot.slane %v251, %v257
        %v259 = vlaneseq
        %v260 = vshrl.u32 %v259, 7
        %v261 = vsub.s32 0, %v260
        %v262 = vrot.slane %v252, %v261
        %265 = vst [vmem:[%s202] sm:$0xf] %v258
        %266 = vst [vmem:[%s202 + $0x4] sm:$0xf] %v262
        %vm267 = vcmp.ne.s32.totalorder %v225, 2
        %vm268 = vcmp.ne.s32.totalorder %v226, 2
        %v269 = vsel %vm267, 1, 0
        %v270 = vsel %vm268, 1, 0
        %v271 = vcvt.s32.f32 %v269
        %v272 = vcvt.s32.f32 %v270
        %v275 = vlaneseq
        %v276 = vshrl.u32 %v275, 7
        %v277 = vsub.s32 0, %v276
        %v278 = vrot.slane %v271, %v277
        %v279 = vlaneseq
        %v280 = vshrl.u32 %v279, 7
        %v281 = vsub.s32 0, %v280
        %v282 = vrot.slane %v272, %v281
        %285 = vst [vmem:[%s209] sm:$0xf] %v278
        %286 = vst [vmem:[%s209 + $0x4] sm:$0xf] %v282
        %vm287 = vcmp.ne.s32.totalorder %v225, 3
        %vm288 = vcmp.ne.s32.totalorder %v226, 3
        %v289 = vsel %vm287, 1, 0
        %v290 = vsel %vm288, 1, 0
        %v291 = vcvt.s32.f32 %v289
        %v292 = vcvt.s32.f32 %v290
        %v295 = vlaneseq
        %v296 = vshrl.u32 %v295, 7
        %v297 = vsub.s32 0, %v296
        %v298 = vrot.slane %v291, %v297
        %v299 = vlaneseq
        %v300 = vshrl.u32 %v299, 7
        %v301 = vsub.s32 0, %v300
        %v302 = vrot.slane %v292, %v301
        %305 = vst [vmem:[%s216] sm:$0xf] %v298
        %306 = vst [vmem:[%s216 + $0x4] sm:$0xf] %v302
        %s307 = sand.u32 %s59, 1
        %s308 = scalar_lea.sflag [#allocation3], %s307
        %s309 = sand.u32 %s59, 1
        %s310 = smul.addr %s309, 8
        %s311 = scalar_lea.vmem [#allocation2], %s310
        %s312 = sand.u32 %s25, 1
        %s313 = scalar_lea.sflag [#allocation5], %s312
        %s314 = sand.u32 %s85, 1
        %s315 = smul.addr %s314, 8
        %s316 = scalar_lea.vmem [#allocation4], %s315
        %s317 = sand.u32 %s25, 1
        %s318 = scalar_lea.sflag [#allocation5], %s317
        %s319 = sand.u32 %s111, 1
        %s320 = smul.addr %s319, 8
        %s321 = scalar_lea.vmem [#allocation6], %s320
        %s322 = sand.u32 %s137, 1
        %s323 = scalar_lea.sflag [#allocation8], %s322
        %s324 = sand.u32 %s137, 1
        %s325 = smul.addr %s324, 8
        %s326 = scalar_lea.vmem [#allocation7], %s325
        // Predicated region
        $region25: #{fn.1} parent=23 // pred_check
          %p327 = pneg %p69
        $region26: #{fn.1} parent=23 // pred_check_branch
          %329 = sbr.rel (%p327) target = $region28
        $region27: #{fn.1} parent=23 // pred_region
          %s330 = smul.u32 2, %s25
          %s332 = ssub.s32 128, 128
          %333 = vsyncadd %s308, %s332
          %s334 = smul.addr %s330, 64
          %s335 = scalar_lea.hbm %s1, %s334
          %s336 = sshll.u32 %s311, 4
          %s337 = int_to_ptr.vmem [resolvable:$true] %s336
          %342 = dma.vmem_to_hbm [thread:$0]  %s337, 128, %s335, %s308, 64, 64, 4
        $region28: #{fn.1} parent=23 // pred_fallthru
          _
        // Predicated region
        $region29: #{fn.1} parent=23 // pred_check
          %p343 = pneg %p95
        $region30: #{fn.1} parent=23 // pred_check_branch
          %345 = sbr.rel (%p343) target = $region32
        $region31: #{fn.1} parent=23 // pred_region
          %s346 = smul.u32 2, %s25
          %s348 = ssub.s32 128, 128
          %349 = vsyncadd %s313, %s348
          %s350 = smul.addr %s346, 64
          %s351 = scalar_lea.hbm %s2, %s350
          %s352 = sshll.u32 %s316, 4
          %s353 = int_to_ptr.vmem [resolvable:$true] %s352
          %358 = dma.vmem_to_hbm [thread:$0]  %s353, 128, %s351, %s313, 64, 64, 4
        $region32: #{fn.1} parent=23 // pred_fallthru
          _
        // Predicated region
        $region33: #{fn.1} parent=23 // pred_check
          %p359 = pneg %p121
        $region34: #{fn.1} parent=23 // pred_check_branch
          %361 = sbr.rel (%p359) target = $region36
        $region35: #{fn.1} parent=23 // pred_region
          %s362 = smul.u32 2, %s25
          %s364 = ssub.s32 128, 128
          %365 = vsyncadd %s318, %s364
          %s366 = smul.addr %s362, 64
          %s367 = scalar_lea.hbm %s3, %s366
          %s368 = sshll.u32 %s321, 4
          %s369 = int_to_ptr.vmem [resolvable:$true] %s368
          %374 = dma.vmem_to_hbm [thread:$0]  %s369, 128, %s367, %s318, 64, 64, 4
        $region36: #{fn.1} parent=23 // pred_fallthru
          _
        // Predicated region
        $region37: #{fn.1} parent=23 // pred_check
          %p375 = pneg %p147
        $region38: #{fn.1} parent=23 // pred_check_branch
          %377 = sbr.rel (%p375) target = $region40
        $region39: #{fn.1} parent=23 // pred_region
          %s378 = smul.u32 2, %s25
          %s380 = ssub.s32 128, 128
          %381 = vsyncadd %s323, %s380
          %s382 = smul.addr %s378, 64
          %s383 = scalar_lea.hbm %s4, %s382
          %s384 = sshll.u32 %s326, 4
          %s385 = int_to_ptr.vmem [resolvable:$true] %s384
          %390 = dma.vmem_to_hbm [thread:$0]  %s385, 128, %s383, %s323, 64, 64, 4
        $region40: #{fn.1} parent=23 // pred_fallthru
          _
      $region24: #{fn.1} parent=5 // pred_fallthru
        _
      %p391 = scmp.le.s32.totalorder 2, %s20
      // Predicated region
      $region41: #{fn.1} parent=5 // pred_check
        %p392 = pneg %p391
      $region42: #{fn.1} parent=5 // pred_check_branch
        %394 = sbr.rel (%p392) target = $region44
      $region43: #{fn.1} parent=5 // pred_region
        %s395 = ssub.s32 %s20, 2
        // Predicated region
        $region45: #{fn.1} parent=43 // pred_check
          %p396 = pneg %p75
        $region46: #{fn.1} parent=43 // pred_check_branch
          %398 = sbr.rel (%p396) target = $region48
        $region47: #{fn.1} parent=43 // pred_region
          %s399 = sand.u32 %s60, 1
          %s400 = scalar_lea.sflag [#allocation3], %s399
          %s401 = sand.u32 %s60, 1
          %s402 = smul.addr %s401, 8
          %s403 = scalar_lea.vmem [#allocation2], %s402
          %404 = dma.done %s400, 128
        $region48: #{fn.1} parent=43 // pred_fallthru
          _
        // Predicated region
        $region49: #{fn.1} parent=43 // pred_check
          %p405 = pneg %p101
        $region50: #{fn.1} parent=43 // pred_check_branch
          %407 = sbr.rel (%p405) target = $region52
        $region51: #{fn.1} parent=43 // pred_region
          %s408 = sand.u32 %s26, 1
          %s409 = scalar_lea.sflag [#allocation5], %s408
          %s410 = sand.u32 %s86, 1
          %s411 = smul.addr %s410, 8
          %s412 = scalar_lea.vmem [#allocation4], %s411
          %413 = dma.done %s409, 128
        $region52: #{fn.1} parent=43 // pred_fallthru
          _
        // Predicated region
        $region53: #{fn.1} parent=43 // pred_check
          %p414 = pneg %p127
        $region54: #{fn.1} parent=43 // pred_check_branch
          %416 = sbr.rel (%p414) target = $region56
        $region55: #{fn.1} parent=43 // pred_region
          %s417 = sand.u32 %s26, 1
          %s418 = scalar_lea.sflag [#allocation5], %s417
          %s419 = sand.u32 %s112, 1
          %s420 = smul.addr %s419, 8
          %s421 = scalar_lea.vmem [#allocation6], %s420
          %422 = dma.done %s418, 128
        $region56: #{fn.1} parent=43 // pred_fallthru
          _
        // Predicated region
        $region57: #{fn.1} parent=43 // pred_check
          %p423 = pneg %p153
        $region58: #{fn.1} parent=43 // pred_check_branch
          %425 = sbr.rel (%p423) target = $region60
        $region59: #{fn.1} parent=43 // pred_region
          %s426 = sand.u32 %s138, 1
          %s427 = scalar_lea.sflag [#allocation8], %s426
          %s428 = sand.u32 %s138, 1
          %s429 = smul.addr %s428, 8
          %s430 = scalar_lea.vmem [#allocation7], %s429
          %431 = dma.done %s427, 128
        $region60: #{fn.1} parent=43 // pred_fallthru
          _
      $region44: #{fn.1} parent=5 // pred_fallthru
        _
    $region6: #{fn.1} parent=1 // loop_footer
      %s24 = sadd.s32 1, %s20
    $region7: #{fn.1} parent=1 // loop_footer_branch
      %19 = sbr.rel target = $region3
    $region8: #{fn.1} parent=1 // loop_exit
      _
    %432 = vsyncpa [#allocation3], 1
    %s433 = scalar_lea.sflag [#allocation3], 1
    %434 = vsyncpa %s433, 1
    %435 = vsyncpa [#allocation5], 1
    %s436 = scalar_lea.sflag [#allocation5], 1
    %437 = vsyncpa %s436, 1
    %438 = vsyncpa [#allocation8], 1
    %s439 = scalar_lea.sflag [#allocation8], 1
    %440 = vsyncpa %s439, 1

</llo_original>
